<compile_context>
chip_gen: v5e
topology: v5e:2x2
jax: 0.10.0
libtpu: 0.0.40
codegen_flags: <defaults>
</compile_context>

<pallas_src>
import builtins
import functools

import jax
import jax.numpy as jnp
from jax.experimental import pallas as pl
from jax.experimental.pallas import tpu as pltpu

_LANES = 128


# ---------------------------------------------------------------------------
# Kernel: elementwise clamp of one (BR, 128) VMEM tile.
# ---------------------------------------------------------------------------
def _clamp_kernel(x_ref, o_ref, *, lo, hi):
    x = x_ref[...]
    lo_v = jnp.asarray(lo, dtype=x.dtype)
    hi_v = jnp.asarray(hi, dtype=x.dtype)
    # min(max(x, lo), hi): NaN propagates, matching torch.clamp.
    o_ref[...] = jnp.minimum(jnp.maximum(x, lo_v), hi_v)


# ---------------------------------------------------------------------------
# Generation-aware block sizing.
# ---------------------------------------------------------------------------
def _target_block_bytes():
    # v5e: 16 MiB default scoped VMEM -> 2 MiB blocks (4 buffers = 8 MiB).
    # v6e / v7x: 32 MiB default scoped VMEM -> 4 MiB blocks (4 buffers = 16 MiB).
    try:
        kind = jax.devices()[0].device_kind.lower()
    except Exception:
        return 2 * 1024 * 1024
    if "v5 lite" in kind or "v5e" in kind or "v5lite" in kind:
        return 2 * 1024 * 1024
    return 4 * 1024 * 1024


# ---------------------------------------------------------------------------
# Wrapper (bounds renamed to lo/hi so Python builtins min/max are never
# shadowed where they are needed for block-size arithmetic).
# ---------------------------------------------------------------------------
@functools.partial(jax.jit, static_argnames=("lo", "hi"))
def _clamp_impl(x, *, lo, hi):
    orig_shape = x.shape
    total = x.size
    if total == 0:
        return x

    if total % _LANES != 0:
        # Lane-sparse layouts (e.g. last dim of 7) would run masked vst.msk
        # stores far off roofline; XLA's fused clip is already a single
        # bandwidth-bound pass, so use it for ragged totals.
        return jnp.clip(x, jnp.asarray(lo, x.dtype), jnp.asarray(hi, x.dtype))

    rows = total // _LANES
    lane = _LANES
    x2d = x.reshape(rows, lane)

    itemsize = x2d.dtype.itemsize
    bytes_per_row = lane * itemsize
    # Packed sublane tile height for this dtype: 8 f32, 16 bf16, 32 int8/fp8.
    sub = 8 * builtins.max(1, 4 // itemsize)

    if rows < 2 * sub:
        # Too small to split usefully: one full-extent block (always legal).
        br = rows
    else:
        br_vmem = builtins.max(sub, _target_block_bytes() // bytes_per_row)
        br_split = rows // 2  # guarantee >= 2 blocks for v7x megacore sharding
        br = builtins.min(br_vmem, br_split)
        br = builtins.max(sub, (br // sub) * sub)

    grid = (pl.cdiv(rows, br),)

    out2d = pl.pallas_call(
        functools.partial(_clamp_kernel, lo=lo, hi=hi),
        out_shape=jax.ShapeDtypeStruct((rows, lane), x2d.dtype),
        grid=grid,
        in_specs=[pl.BlockSpec((br, lane), lambda i: (i, 0))],
        out_specs=pl.BlockSpec((br, lane), lambda i: (i, 0)),
        compiler_params=pltpu.CompilerParams(
            dimension_semantics=("parallel",)),
    )(x2d)

    return out2d.reshape(orig_shape)


def clamp(x, min=0, max=1):
    """Functional clamp matching torch.clamp(x, min, max)."""
    return _clamp_impl(x, lo=min, hi=max)


class Clamp:
    """JAX/Pallas equivalent of segmentation_models_pytorch Clamp module."""

    def __init__(self, min=0, max=1):
        self.min, self.max = min, max

    def __call__(self, x):
        return clamp(x, min=self.min, max=self.max)


if __name__ == "__main__":
    key = jax.random.PRNGKey(0)
    # NCHW activations, scaled so values fall both below 0 and above 1.
    x = 2.0 * jax.random.normal(key, (2, 4, 16, 16), dtype=jnp.float32)

    m = Clamp(min=0, max=1)
    out = jax.block_until_ready(m(x))
    ref = jnp.clip(x, 0.0, 1.0)
    assert out.shape == x.shape
    assert out.dtype == x.dtype
    assert bool(jnp.all(out == ref))

    # Non-default bounds.
    m2 = Clamp(min=-0.5, max=0.5)
    out2 = jax.block_until_ready(m2(x))
    ref2 = jnp.clip(x, -0.5, 0.5)
    assert bool(jnp.all(out2 == ref2))

    # bf16 input (exercises dtype-aware sublane rounding / packed layout).
    xb = x.astype(jnp.bfloat16)
    out_b = jax.block_until_ready(clamp(xb, min=0, max=1))
    ref_b = jnp.minimum(jnp.maximum(xb, jnp.bfloat16(0)), jnp.bfloat16(1))
    assert out_b.dtype == jnp.bfloat16
    assert bool(jnp.all(out_b == ref_b))

    # Multi-block path (>= 2 grid steps) on a slightly larger slab.
    z = 2.0 * jax.random.normal(jax.random.PRNGKey(2), (4, 64, 128),
                                dtype=jnp.float32)
    out_z = jax.block_until_ready(clamp(z, min=0, max=1))
    assert bool(jnp.all(out_z == jnp.clip(z, 0.0, 1.0)))

    # Shape whose total element count is not a multiple of 128 (fallback path).
    y = jax.random.normal(jax.random.PRNGKey(1), (3, 5, 7), dtype=jnp.float32)
    out3 = jax.block_until_ready(clamp(y, min=0, max=1))
    ref3 = jnp.clip(y, 0.0, 1.0)
    assert bool(jnp.all(out3 == ref3))

    print("KERNEL_OK")
</pallas_src>

<mosaic_0001>
module attributes {stable_mosaic.version = 11 : i64} {
  func.func @_clamp_kernel(%arg0: i32, %arg1: memref<8x128xf32, #tpu.memory_space<vmem>>, %arg2: memref<8x128xf32, #tpu.memory_space<vmem>>) attributes {dimension_semantics = [#tpu.dimension_semantics<parallel>], iteration_bounds = array<i64: 2>, scalar_prefetch = 0 : i64, scratch_operands = 0 : i64, tpu.core_type = #tpu.core_type<tc>, window_params = [{transform_indices = @transform_0, window_bounds = array<i64: 8, 128>}, {transform_indices = @transform_1, window_bounds = array<i64: 8, 128>}]} {
    %c0 = arith.constant 0 : index
    %c0_0 = arith.constant 0 : index
    %0 = vector.load %arg1[%c0, %c0_0] : memref<8x128xf32, #tpu.memory_space<vmem>>, vector<8x128xf32>
    %cst = arith.constant 0.000000e+00 : f32
    %1 = vector.broadcast %cst : f32 to vector<8x128xf32>
    %2 = arith.maximumf %0, %1 : vector<8x128xf32>
    %cst_1 = arith.constant 1.000000e+00 : f32
    %3 = vector.broadcast %cst_1 : f32 to vector<8x128xf32>
    %4 = arith.minimumf %2, %3 : vector<8x128xf32>
    %c0_2 = arith.constant 0 : index
    %c0_3 = arith.constant 0 : index
    %5 = vector.load %arg2[%c0_2, %c0_3] : memref<8x128xf32, #tpu.memory_space<vmem>>, vector<8x128xf32>
    tpu.vector_store %arg2[%c0_2, %c0_3], %4 {strides = array<i32>} : memref<8x128xf32, #tpu.memory_space<vmem>>, vector<8x128xf32>,
    return
  }
  func.func @transform_0(%arg0: i32) -> (i32, i32) {
    %c0_i32 = arith.constant 0 : i32
    %c0_i32_0 = arith.constant 0 : i32
    return %arg0, %c0_i32 : i32, i32
  }
  func.func @transform_1(%arg0: i32) -> (i32, i32) {
    %c0_i32 = arith.constant 0 : i32
    %c0_i32_0 = arith.constant 0 : i32
    return %arg0, %c0_i32 : i32, i32
  }
}

</mosaic_0001>

<llo_original>
// kernel: _clamp_impl.1
$region0: #{_clamp_impl.1}
  #allocation0 [shape = 'u32[]', space=smem, size = 0x4, offset = 0x4, fixed_abs, tag = 'smem constant byte address 0x4 - core index']
  #allocation1 [shape = 'u32[72,128]{1,0:T(1,128)}', space=vmem, size = 0x9000, scoped, tag = 'internal scratch']
  %s0 = inlined_call_operand.vmem [shape: f32[16,128], index: 0, kind: input, shape index: {}]
  %s1 = inlined_call_operand.vmem [shape: f32[16,128], index: 1, kind: output, shape index: {}]
  %s2 = sld [smem:[#allocation0]]
  $region37: #{_clamp_impl.1} parent=0
    _
  %s4 = ssub.s32 1, %s2
  %s5 = scalar_select 0, %s4, %s2
  loop: start=0, step=1, limit=4
  $region2: #{_clamp_impl.1} parent=0 // loop_pre_header
    _
  $region3: #{_clamp_impl.1} parent=0 // loop_header
    %s7 = sphi 0, %s11
    %p8 = scmp.ge.s32.totalorder %s7, 4
    %s17 = sphi 0, %s19
    %s20 = sphi 0, %s17
    %s21 = sphi 0, %s20
    %s37 = sphi 0, %s21
    %s43 = sphi 0, %s45
    %s46 = sphi 0, %s43
    %s47 = sphi 0, %s46
    %s63 = sphi 0, %s47
  $region4: #{_clamp_impl.1} parent=0 // loop_header_branch
    %10 = sbr.rel (%p8) target = $region8
  $region5: #{_clamp_impl.1} parent=0 // loop_body
    %s12 = ssub.s32 %s7, 1
    %s13 = ssub.s32 %s7, 2
    %s14 = sadd.s32 %s7, 1
    %s15 = ssub.s32 %s7, %s14
    %p16 = scmp.eq.s32.totalorder %s15, 0
    %s18 = sadd.s32 %s17, 1
    %s19 = scalar_select %p16, %s17, %s18
    %p22 = pneg %p16
    %p23 = scmp.eq.s32.totalorder %s7, 1
    %p24 = por %p22, %p23
    %p25 = scmp.ne.s32.totalorder %s17, %s20
    %p26 = scmp.eq.s32.totalorder %s7, 0
    %p27 = por %p25, %p26
    %p28 = scmp.ne.s32.totalorder %s17, %s20
    %p29 = scmp.eq.s32.totalorder %s12, 1
    %p30 = por %p28, %p29
    %p31 = scmp.ne.s32.totalorder %s20, %s21
    %p32 = scmp.eq.s32.totalorder %s12, 0
    %p33 = por %p31, %p32
    %p34 = scmp.ne.s32.totalorder %s20, %s21
    %p35 = scmp.eq.s32.totalorder %s13, 1
    %p36 = por %p34, %p35
    %p38 = scmp.ne.s32.totalorder %s21, %s37
    %p39 = scmp.eq.s32.totalorder %s13, 0
    %p40 = por %p38, %p39
    %s41 = ssub.s32 %s7, %s14
    %p42 = scmp.eq.s32.totalorder %s41, 0
    %s44 = sadd.s32 %s43, 1
    %s45 = scalar_select %p42, %s43, %s44
    %p48 = pneg %p42
    %p49 = scmp.eq.s32.totalorder %s7, 1
    %p50 = por %p48, %p49
    %p51 = scmp.ne.s32.totalorder %s43, %s46
    %p52 = scmp.eq.s32.totalorder %s7, 0
    %p53 = por %p51, %p52
    %p54 = scmp.ne.s32.totalorder %s43, %s46
    %p55 = scmp.eq.s32.totalorder %s12, 1
    %p56 = por %p54, %p55
    %p57 = scmp.ne.s32.totalorder %s46, %s47
    %p58 = scmp.eq.s32.totalorder %s12, 0
    %p59 = por %p57, %p58
    %p60 = scmp.ne.s32.totalorder %s46, %s47
    %p61 = scmp.eq.s32.totalorder %s13, 1
    %p62 = por %p60, %p61
    %p64 = scmp.ne.s32.totalorder %s47, %s63
    %p65 = scmp.eq.s32.totalorder %s13, 0
    %p66 = por %p64, %p65
    %p67 = scmp.le.s32.totalorder 1, %s7
    %p68 = scmp.lt.s32.totalorder %s7, 3
    %p69 = pnand %p67, %p68
    %p70 = pneg %p69
    // Predicated region
    $region9: #{_clamp_impl.1} parent=5 // pred_check
      _
    $region10: #{_clamp_impl.1} parent=5 // pred_check_branch
      %72 = sbr.rel (%p69) target = $region12
    $region11: #{_clamp_impl.1} parent=5 // pred_region
      %s73 = ssub.s32 %s7, 1
    $region12: #{_clamp_impl.1} parent=5 // pred_fallthru
      _
    %p74 = scmp.lt.s32.totalorder %s7, 2
    // Predicated region
    $region13: #{_clamp_impl.1} parent=5 // pred_check
      %p75 = pneg %p74
    $region14: #{_clamp_impl.1} parent=5 // pred_check_branch
      %77 = sbr.rel (%p75) target = $region16
    $region15: #{_clamp_impl.1} parent=5 // pred_region
      // Predicated region
      $region17: #{_clamp_impl.1} parent=15 // pred_check
        %p78 = pneg %p27
      $region18: #{_clamp_impl.1} parent=15 // pred_check_branch
        %80 = sbr.rel (%p78) target = $region20
      $region19: #{_clamp_impl.1} parent=15 // pred_region
        %p81 = scmp.lt.s32.totalorder %s7, 1
        %s82 = scalar_select %p81, %s7, 1
        %s83 = smul.addr %s82, 8
        %s84 = scalar_lea.vmem %s0, %s83
      $region20: #{_clamp_impl.1} parent=15 // pred_fallthru
        _
    $region16: #{_clamp_impl.1} parent=5 // pred_fallthru
      _
    %p85 = scmp.le.s32.totalorder 1, %s7
    %p86 = scmp.lt.s32.totalorder %s7, 3
    %p87 = pnand %p85, %p86
    %p88 = pneg %p87
    // Predicated region
    $region21: #{_clamp_impl.1} parent=5 // pred_check
      _
    $region22: #{_clamp_impl.1} parent=5 // pred_check_branch
      %90 = sbr.rel (%p87) target = $region24
    $region23: #{_clamp_impl.1} parent=5 // pred_region
      %s91 = ssub.s32 %s7, 1
      %p92 = scmp.lt.s32.totalorder %s12, 1
      %s93 = scalar_select %p92, %s12, 1
      %s94 = smul.addr %s93, 8
      %s95 = scalar_lea.vmem %s0, %s94
      %p96 = pneg %p33
      %p97 = pneg %p30
      %p98 = pneg %p59
      %p99 = pneg %p56
      %p100 = scmp.lt.s32.totalorder %s12, 1
      %s101 = scalar_select %p100, %s12, 1
      %s102 = smul.addr %s101, 8
      %s103 = scalar_lea.vmem %s1, %s102
      %p104 = scmp.lt.s32.totalorder %s12, 1
      %s105 = scalar_select %p104, %s12, 1
      %s106 = smul.addr %s105, 8
      %s107 = scalar_lea.vmem %s0, %s106
      %p108 = scmp.lt.s32.totalorder %s12, 1
      %s109 = scalar_select %p108, %s12, 1
      %s110 = smul.addr %s109, 8
      %s111 = scalar_lea.vmem %s1, %s110
      %v112 = vld [vmem:[%s107] sm:$0xff]
      %v113 = vmax.f32 %v112, 0.0
      %v114 = vmin.f32 %v113, 1.0
      %115 = vst [vmem:[%s111] sm:$0xff] %v114
      %p116 = scmp.lt.s32.totalorder %s12, 1
      %s117 = scalar_select %p116, %s12, 1
      %s118 = smul.addr %s117, 8
      %s119 = scalar_lea.vmem %s1, %s118
      // Predicated region
      $region25: #{_clamp_impl.1} parent=23 // pred_check
        %p120 = pneg %p56
      $region26: #{_clamp_impl.1} parent=23 // pred_check_branch
        %122 = sbr.rel (%p120) target = $region28
      $region27: #{_clamp_impl.1} parent=23 // pred_region
        _
      $region28: #{_clamp_impl.1} parent=23 // pred_fallthru
        _
    $region24: #{_clamp_impl.1} parent=5 // pred_fallthru
      _
    %p123 = scmp.le.s32.totalorder 2, %s7
    // Predicated region
    $region29: #{_clamp_impl.1} parent=5 // pred_check
      %p124 = pneg %p123
    $region30: #{_clamp_impl.1} parent=5 // pred_check_branch
      %126 = sbr.rel (%p124) target = $region32
    $region31: #{_clamp_impl.1} parent=5 // pred_region
      %s127 = ssub.s32 %s7, 2
      // Predicated region
      $region33: #{_clamp_impl.1} parent=31 // pred_check
        %p128 = pneg %p62
      $region34: #{_clamp_impl.1} parent=31 // pred_check_branch
        %130 = sbr.rel (%p128) target = $region36
      $region35: #{_clamp_impl.1} parent=31 // pred_region
        %p131 = scmp.lt.s32.totalorder %s13, 1
        %s132 = scalar_select %p131, %s13, 1
        %s133 = smul.addr %s132, 8
        %s134 = scalar_lea.vmem %s1, %s133
      $region36: #{_clamp_impl.1} parent=31 // pred_fallthru
        _
    $region32: #{_clamp_impl.1} parent=5 // pred_fallthru
      _
  $region6: #{_clamp_impl.1} parent=0 // loop_footer
    %s11 = sadd.s32 1, %s7
  $region7: #{_clamp_impl.1} parent=0 // loop_footer_branch
    %6 = sbr.rel target = $region3
  $region8: #{_clamp_impl.1} parent=0 // loop_exit
    _

</llo_original>
